<compile_context>
chip_gen: v7x
topology: tpu7x:2x2x1
jax: 0.10.0
libtpu: 0.0.40
codegen_flags: <defaults>
</compile_context>

<pallas_src>
import jax
import jax.numpy as jnp
from jax.experimental import pallas as pl
from jax.experimental.pallas import tpu as pltpu

LANES = 128            # vreg lane width
MAX_BLOCK_ROWS = 2048  # (2048, 128) f32 = 1 MiB per buffer


def _logreg_kernel(w_ref, b_ref, x_ref, o_ref):
    # w_ref, b_ref: (1,) f32 scalars in SMEM.
    # x_ref, o_ref: (block_rows, 128) VMEM tiles, batch laid out along lanes.
    w = w_ref[0]
    b = b_ref[0]
    z = x_ref[...] * w + b                      # VPU fused multiply-add, no MXU
    # sigmoid via a single EUP transcendental: sigmoid(z) = 0.5*tanh(z/2) + 0.5
    o_ref[...] = 0.5 * jnp.tanh(0.5 * z) + 0.5


def _choose_block_rows(rows: int) -> int:
    if rows <= 8:
        # Block == full array: allowed even when not a multiple of (8, 128).
        return rows
    # Prefer >= 2 grid steps so v7x's two TensorCores both get a share of the
    # batch; cap at MAX_BLOCK_ROWS; keep the sublane dim a multiple of 8.
    target = min(MAX_BLOCK_ROWS, pl.cdiv(rows, 2))
    return max(8, (target // 8) * 8)


def logistic_regression_lane_dense(x2d, w, b):
    """Forward on the lane-dense (rows, 128) layout.  No host-side copies."""
    rows, lanes = x2d.shape
    assert lanes == LANES and w.shape == (1, 1) and b.shape == (1,)
    block_rows = _choose_block_rows(rows)
    grid = (pl.cdiv(rows, block_rows),)         # partial last block is masked
    return pl.pallas_call(
        _logreg_kernel,
        out_shape=jax.ShapeDtypeStruct((rows, LANES), jnp.float32),
        grid=grid,
        in_specs=[
            pl.BlockSpec(memory_space=pltpu.MemorySpace.SMEM),    # w scalar
            pl.BlockSpec(memory_space=pltpu.MemorySpace.SMEM),    # b scalar
            pl.BlockSpec((block_rows, LANES), lambda i: (i, 0)),  # x tile
        ],
        out_specs=pl.BlockSpec((block_rows, LANES), lambda i: (i, 0)),
        compiler_params=pltpu.CompilerParams(
            # row-blocks are independent: lets v7x shard the batch over both TCs
            dimension_semantics=("parallel",),
        ),
    )(w.reshape(-1), b.reshape(-1), x2d)


def logistic_regression(x, w, b):
    """Forward of nn.Linear(1, 1) + sigmoid with the PyTorch (N, 1) interface.

    Only pads the flat batch up to the next multiple of 128 lanes (<=127
    elements); callers that can consume the lane-dense layout should use
    logistic_regression_lane_dense directly and skip the pad/slice entirely.
    """
    n, f = x.shape
    assert f == 1 and w.shape == (1, 1) and b.shape == (1,)
    rows = pl.cdiv(n, LANES)
    n_padded = rows * LANES
    x2d = jnp.pad(x.reshape(-1), (0, n_padded - n)).reshape(rows, LANES)
    out2d = logistic_regression_lane_dense(x2d, w, b)
    # Strip the (<=127-element) lane padding; restore PyTorch's (N, 1) shape.
    return out2d.reshape(-1)[:n].reshape(n, 1)


if __name__ == "__main__":
    # Same data as the PyTorch script: shape (9, 1) float32
    x = jnp.array([1, 5, 10, 10, 25, 50, 70, 75, 100],
                  dtype=jnp.float32).reshape(-1, 1)

    # Deterministic parameter init mimicking nn.Linear(1, 1):
    # uniform(-1/sqrt(in_features), 1/sqrt(in_features)) = uniform(-1, 1)
    key = jax.random.PRNGKey(0)
    kw, kb = jax.random.split(key)
    w = jax.random.uniform(kw, (1, 1), jnp.float32, minval=-1.0, maxval=1.0)
    b = jax.random.uniform(kb, (1,), jnp.float32, minval=-1.0, maxval=1.0)

    out = logistic_regression(x, w, b)
    jax.block_until_ready(out)

    # Reference check in plain JAX
    ref = jax.nn.sigmoid(x @ w.T + b)
    assert out.shape == (9, 1)
    assert jnp.allclose(out, ref, atol=1e-5), (out, ref)

    # Exercise the multi-block grid + masked partial last block + saturation
    # (large |z|) at a slightly larger batch.
    n2 = 4097
    x2 = jax.random.normal(jax.random.PRNGKey(1), (n2, 1), jnp.float32) * 50.0
    out2 = logistic_regression(x2, w, b)
    jax.block_until_ready(out2)
    ref2 = jax.nn.sigmoid(x2 @ w.T + b)
    assert out2.shape == (n2, 1)
    assert jnp.allclose(out2, ref2, atol=1e-5)

    print("KERNEL_OK")
</pallas_src>

<mosaic_0001>
module attributes {stable_mosaic.version = 11 : i64} {
  func.func @_logreg_kernel(%arg0: i32, %arg1: memref<1xf32, #tpu.memory_space<smem>>, %arg2: memref<1xf32, #tpu.memory_space<smem>>, %arg3: memref<1x128xf32, #tpu.memory_space<vmem>>, %arg4: memref<1x128xf32, #tpu.memory_space<vmem>>) attributes {dimension_semantics = [#tpu.dimension_semantics<parallel>], iteration_bounds = array<i64: 1>, scalar_prefetch = 0 : i64, scratch_operands = 0 : i64, tpu.core_type = #tpu.core_type<tc>, window_params = [{transform_indices = @transform_0, window_bounds = array<i64: 1>}, {transform_indices = @transform_1, window_bounds = array<i64: 1>}, {transform_indices = @transform_2, window_bounds = array<i64: 1, 128>}, {transform_indices = @transform_3, window_bounds = array<i64: 1, 128>}]} {
    %c0 = arith.constant 0 : index
    %0 = memref.load %arg1[%c0] : memref<1xf32, #tpu.memory_space<smem>>
    %c0_0 = arith.constant 0 : index
    %1 = memref.load %arg2[%c0_0] : memref<1xf32, #tpu.memory_space<smem>>
    %c0_1 = arith.constant 0 : index
    %c0_2 = arith.constant 0 : index
    %2 = vector.load %arg3[%c0_1, %c0_2] : memref<1x128xf32, #tpu.memory_space<vmem>>, vector<1x128xf32>
    %3 = vector.broadcast %0 : f32 to vector<1x128xf32>
    %4 = arith.mulf %2, %3 : vector<1x128xf32>
    %5 = vector.broadcast %1 : f32 to vector<1x128xf32>
    %6 = arith.addf %4, %5 : vector<1x128xf32>
    %cst = arith.constant 5.000000e-01 : f32
    %7 = vector.broadcast %cst : f32 to vector<1x128xf32>
    %8 = arith.mulf %7, %6 : vector<1x128xf32>
    %9 = math.tanh %8 : vector<1x128xf32>
    %cst_3 = arith.constant 5.000000e-01 : f32
    %10 = vector.broadcast %cst_3 : f32 to vector<1x128xf32>
    %11 = arith.mulf %10, %9 : vector<1x128xf32>
    %cst_4 = arith.constant 5.000000e-01 : f32
    %12 = vector.broadcast %cst_4 : f32 to vector<1x128xf32>
    %13 = arith.addf %11, %12 : vector<1x128xf32>
    %c0_5 = arith.constant 0 : index
    %c0_6 = arith.constant 0 : index
    %14 = vector.load %arg4[%c0_5, %c0_6] : memref<1x128xf32, #tpu.memory_space<vmem>>, vector<1x128xf32>
    tpu.vector_store %arg4[%c0_5, %c0_6], %13 {strides = array<i32>} : memref<1x128xf32, #tpu.memory_space<vmem>>, vector<1x128xf32>,
    return
  }
  func.func @transform_0(%arg0: i32) -> i32 {
    %c0_i32 = arith.constant 0 : i32
    %c0_i32_0 = arith.constant 0 : i32
    return %c0_i32 : i32
  }
  func.func @transform_1(%arg0: i32) -> i32 {
    %c0_i32 = arith.constant 0 : i32
    %c0_i32_0 = arith.constant 0 : i32
    return %c0_i32 : i32
  }
  func.func @transform_2(%arg0: i32) -> (i32, i32) {
    %c0_i32 = arith.constant 0 : i32
    %c0_i32_0 = arith.constant 0 : i32
    return %arg0, %c0_i32 : i32, i32
  }
  func.func @transform_3(%arg0: i32) -> (i32, i32) {
    %c0_i32 = arith.constant 0 : i32
    %c0_i32_0 = arith.constant 0 : i32
    return %arg0, %c0_i32 : i32, i32
  }
}

</mosaic_0001>

<llo_original>
// kernel: tpu_custom_call.1
$region0: #{tpu_custom_call.1}
  #allocation0 [shape = 'u32[]', space=smem, size = 0x4, offset = 0x4, fixed_abs, tag = 'smem constant byte address 0x4 - core index']
  #allocation1 [shape = 'u32[144,128]{1,0:T(1,128)}', space=vmem, size = 0x12000, scoped, tag = 'internal scratch']
  #allocation2 [shape = 'f32[1]{0:T(128)S(6)}', space=smem, size = 0x200, scoped, tag = 'scoped memory for tpu_custom_call.1']
  #allocation3 [shape = 'f32[1]{0:T(128)S(6)}', space=smem, size = 0x200, scoped, tag = 'scoped memory for tpu_custom_call.1']
  %s0 = inlined_call_operand.<no memory space> [shape: f32[1], index: 0, kind: input, shape index: {}]
  %s1 = inlined_call_operand.<no memory space> [shape: f32[1], index: 1, kind: input, shape index: {}]
  %s2 = inlined_call_operand.vmem [shape: f32[1,128], index: 2, kind: input, shape index: {}]
  %s3 = inlined_call_operand.hbm [shape: f32[1,128], index: 3, kind: output, shape index: {}]
  %s4 = sld [smem:[#allocation0]]
  $region22: #{tpu_custom_call.1} parent=0
    _
  %s6 = ssub.s32 1, %s4
  %s7 = scalar_select 0, %s6, %s4
  %8 = sst [smem:[#allocation2]] %s0
  %9 = sst [smem:[#allocation3]] %s1
  $region1: #{tpu_custom_call.1} parent=0
    #allocation4 [shape = 'u8[512]{0}', space=vmem, size = 0x400, scoped, tag = 'output window, operand 0, single buffered']
    #allocation5 [shape = 's32[1]{0}', space=sflag, size = 0x4, scoped, tag = 'scoped memory for tpu_custom_call.1']
    %10 = vsyncpa [#allocation5], 0
    // Predicated region
    $region2: #{tpu_custom_call.1} parent=1 // pred_check
      _
    $region3: #{tpu_custom_call.1} parent=1 // pred_check_branch
      %12 = sbr.rel (0) target = $region5
    $region4: #{tpu_custom_call.1} parent=1 // pred_region
      _
    $region5: #{tpu_custom_call.1} parent=1 // pred_fallthru
      _
    // Predicated region
    $region6: #{tpu_custom_call.1} parent=1 // pred_check
      _
    $region7: #{tpu_custom_call.1} parent=1 // pred_check_branch
      %14 = sbr.rel (0) target = $region9
    $region8: #{tpu_custom_call.1} parent=1 // pred_region
      _
    $region9: #{tpu_custom_call.1} parent=1 // pred_fallthru
      _
    // Predicated region
    $region10: #{tpu_custom_call.1} parent=1 // pred_check
      _
    $region11: #{tpu_custom_call.1} parent=1 // pred_check_branch
      %16 = sbr.rel (0) target = $region13
    $region12: #{tpu_custom_call.1} parent=1 // pred_region
      _
    $region13: #{tpu_custom_call.1} parent=1 // pred_fallthru
      _
    %s17 = sld [smem:[#allocation2]]
    %s18 = sld [smem:[#allocation3]]
    %v19 = vld [vmem:[%s2] sm:$0x1]
    %v20 = vstv %s17
    %v21 = vmul.f32 %v19, %v20
    %v22 = vstv %s18
    %v23 = vadd.f32 %v21, %v22
    %v24 = vmul.f32 %v23, 0.5
    %v25 = vtanh.pop %v24
    %v26 = vmul.f32 %v25, 0.5
    %v27 = vadd.f32 %v26, 0.5
    %28 = vst [vmem:[#allocation4] sm:$0x1] %v27
    // Predicated region
    $region14: #{tpu_custom_call.1} parent=1 // pred_check
      _
    $region15: #{tpu_custom_call.1} parent=1 // pred_check_branch
      %30 = sbr.rel (0) target = $region17
    $region16: #{tpu_custom_call.1} parent=1 // pred_region
      %s32 = ssub.s32 16, 16
      %33 = vsyncadd [#allocation5], %s32
      %s35 = sshll.u32 [#allocation4], 4
      %s36 = int_to_ptr.vmem [resolvable:$true] %s35
      %38 = dma.vmem_to_hbm [thread:$0]  %s36, 16, %s3, [#allocation5]
    $region17: #{tpu_custom_call.1} parent=1 // pred_fallthru
      _
    // Predicated region
    $region18: #{tpu_custom_call.1} parent=1 // pred_check
      _
    $region19: #{tpu_custom_call.1} parent=1 // pred_check_branch
      %40 = sbr.rel (0) target = $region21
    $region20: #{tpu_custom_call.1} parent=1 // pred_region
      %41 = dma.done [#allocation5], 16
    $region21: #{tpu_custom_call.1} parent=1 // pred_fallthru
      _
    %42 = vsyncpa [#allocation5], 1

</llo_original>
